<compile_context>
chip_gen: v6e
topology: v6e:2x2x1
jax: 0.10.0
libtpu: 0.0.40
codegen_flags: <defaults>
</compile_context>

<pallas_src>
import jax
import jax.numpy as jnp
from jax import lax
from jax.experimental import pallas as pl
from jax.experimental.pallas import tpu as pltpu


_LANES = 128
_DEFAULT_TILE_ROWS = 2048   # sublane rows per spatial tile (x 128 lanes)


def _cdiv(a, b):
    return -(-a // b)


def _make_stats_kernel(C, TN, num_inner, p_rows, S, need_mask, binary_targets):
    """Builds the per-(batch, outer-chunk) statistics kernel.

    Block views:
      x_ref / t_ref : (1, C, TN, 128) logits / one-hot targets (native dtype)
      out_ref       : (1, 1, C*n_quant*p_rows, 128) f32 lane/sublane partial sums,
                      resident across the inner (reduction) grid axis.
                      Row layout: class-major, then quantity [TP, sum(p), sum(t), (nnz)],
                      then p_rows partial rows.
    """

    def kernel(x_ref, t_ref, out_ref):
        o = pl.program_id(1)
        i = pl.program_id(2)

        @pl.when(i == 0)
        def _():
            out_ref[...] = jnp.zeros_like(out_ref)

        # Logical spatial-tile id.  It may exceed the number of real tiles when
        # the 2-way outer split has an overhang step; the element mask below
        # zeroes that step's contribution (its DMA index is clamped in-bounds).
        jj = o * num_inner + i

        if need_mask:
            rem = S - jj * (TN * _LANES)          # valid flat elements left in this tile
            ridx = lax.broadcasted_iota(jnp.int32, (TN, _LANES), 0)
            lidx = lax.broadcasted_iota(jnp.int32, (TN, _LANES), 1)
            valid = (ridx * _LANES + lidx) < rem

        # Per-class (TN, 128) lane/sublane-dense slabs, upcast in-kernel.
        xs = [x_ref[0, c].astype(jnp.float32) for c in range(C)]

        # Numerically-stable softmax over the class axis: purely elementwise
        # (VPU + EUP), no cross-lane/sublane work.
        m = xs[0]
        for c in range(1, C):
            m = jnp.maximum(m, xs[c])
        es = [jnp.exp(xc - m) for xc in xs]
        den = es[0]
        for c in range(1, C):
            den = den + es[c]
        inv_den = 1.0 / den       # exact divide (keeps 1e-4 validation tight)

        def reduce_rows(a):       # (TN, 128) -> (p_rows, 128)
            if p_rows == 8:
                # Groups of 8 sublane rows are whole vregs: this is a pure-VPU
                # vreg-add reduction (no XLU cross-sublane collapse per quantity).
                return a.reshape(TN // 8, 8, _LANES).sum(axis=0)
            return jnp.sum(a, axis=0, keepdims=True)   # tiny-input fallback

        parts = []
        for c in range(C):
            p_c = es[c] * inv_den
            t_c = t_ref[0, c].astype(jnp.float32)
            if need_mask:
                # Masking p and t suffices: every statistic is a sum of p, t or
                # p*t, and jnp.where selects (garbage in the ragged region can
                # never propagate, even if it is NaN/Inf).
                p_c = jnp.where(valid, p_c, 0.0)
                t_c = jnp.where(valid, t_c, 0.0)
            parts.append(reduce_rows(p_c * t_c))                       # TP
            parts.append(reduce_rows(p_c))                             # sum(p)
            parts.append(reduce_rows(t_c))                             # sum(t)
            if not binary_targets:
                parts.append(reduce_rows(jnp.where(t_c != 0.0, 1.0, 0.0)))  # nnz(t)

        # One full-block accumulate into the resident output block.
        out_ref[0, 0] += jnp.concatenate(parts, axis=0)

    return kernel


def weighted_focal_tversky_loss_pallas(inputs, targets, *, smooth=1e-6,
                                       alpha=0.7, beta=0.3, gamma=0.75,
                                       binary_targets=True,
                                       max_tile_rows=_DEFAULT_TILE_ROWS):
    """WeightedFocalTverskyLoss()(inputs, targets) -> scalar f32 loss.

    inputs  : (B, C, *spatial) logits            (any float dtype)
    targets : (B, C, *spatial) one-hot reference (any float/int dtype; pass the
              narrowest dtype you have upstream — the kernel upcasts per tile)
    binary_targets : if True (default, matches the module's one-hot contract)
              count_nonzero(t) is taken as sum(t); set False for soft targets.
    """
    B, C = inputs.shape[0], inputs.shape[1]
    if C != 3:
        raise ValueError("WeightedFocalTverskyLoss hardcodes 3-class weights (C must be 3)")

    S = 1
    for d in inputs.shape[2:]:
        S *= d

    NS = _cdiv(S, _LANES)
    S_ceil = NS * _LANES

    x = inputs.reshape(B, C, S)
    t = targets.reshape(B, C, S)
    if S_ceil != S:
        # TODO(synk): lane-ragged spatial sizes (S % 128 != 0) need one pad-to-128
        # copy so the (NS, 128) view exists; padded voxels are masked in-kernel
        # (no wrapper-side correction).  Choose D*H*W % 128 == 0 to avoid it.
        x = jnp.pad(x, ((0, 0), (0, 0), (0, S_ceil - S)))
        t = jnp.pad(t, ((0, 0), (0, 0), (0, S_ceil - S)))
    x = x.reshape(B, C, NS, _LANES)
    t = t.reshape(B, C, NS, _LANES)

    # Spatial tile: biggest legal tile that fits the VMEM budget.
    if NS <= max_tile_rows or NS <= 8:
        TN = NS                               # full extent (always a legal block dim)
    else:
        TN = max(8, (max_tile_rows // 8) * 8)  # multiple of 8 sublane rows
    num_tiles = _cdiv(NS, TN)

    # 2-way outer split of the spatial tiles so a second TensorCore (v7x) has
    # work even at B=1; harmless on single-core chips.  Skip num_tiles==3 (the
    # only case where the overhang would cost a significant extra tile read).
    num_outer = 2 if (num_tiles >= 4 or num_tiles == 2) else 1
    num_inner = _cdiv(num_tiles, num_outer)

    p_rows = 8 if (TN % 8 == 0) else 1
    n_quant = 3 if binary_targets else 4
    need_mask = (num_outer * num_inner * TN * _LANES != S)
    QCP = C * n_quant * p_rows

    kernel = _make_stats_kernel(C, TN, num_inner, p_rows, S, need_mask, binary_targets)

    def in_map(b, o, i):
        # Clamp keeps the overhang step's DMA in-bounds; its contribution is
        # zeroed in-kernel via the element mask (which uses the unclamped id).
        return (b, 0, jnp.minimum(o * num_inner + i, num_tiles - 1), 0)

    stats = pl.pallas_call(
        kernel,
        out_shape=jax.ShapeDtypeStruct((B, num_outer, QCP, _LANES), jnp.float32),
        grid_spec=pltpu.PrefetchScalarGridSpec(
            num_scalar_prefetch=0,
            grid=(B, num_outer, num_inner),
            in_specs=[
                pl.BlockSpec((1, C, TN, _LANES), in_map),
                pl.BlockSpec((1, C, TN, _LANES), in_map),
            ],
            out_specs=pl.BlockSpec((1, 1, QCP, _LANES), lambda b, o, i: (b, o, 0, 0)),
        ),
        compiler_params=pltpu.CompilerParams(
            dimension_semantics=("parallel", "parallel", "arbitrary"),
            vmem_limit_bytes=48 * 1024 * 1024,
        ),
    )(x, t)

    # Tiny O(B*C) finalization in plain JAX.
    stats = stats.reshape(B, num_outer, C, n_quant, p_rows, _LANES).sum(axis=(1, 4, 5))
    tp = stats[:, :, 0]
    sp = stats[:, :, 1]
    st = stats[:, :, 2]
    nz = st if binary_targets else stats[:, :, 3]

    fp = sp - tp                              # sum((1 - t) * p)
    fn = st - tp                              # sum(t * (1 - p))

    inv_counts = 1.0 / nz.sum(0)              # 1 / count_nonzero per class, (C,)
    weights = inv_counts / inv_counts.sum()   # normalized class weights

    tversky = (tp + smooth) / (tp + alpha * fp + beta * fn + smooth)   # (B, C)
    weighted_tversky = (weights * tversky).sum()
    return jnp.power(1.0 - weighted_tversky, gamma)


def weighted_focal_tversky_loss_reference(inputs, targets, smooth=1e-6,
                                          alpha=0.7, beta=0.3, gamma=0.75):
    """Pure-JAX mirror of the PyTorch forward (for validation)."""
    x = inputs.astype(jnp.float32)
    t = targets.astype(jnp.float32)
    a = 1.0 / jnp.count_nonzero(t[:, 0]).astype(jnp.float32)
    b = 1.0 / jnp.count_nonzero(t[:, 1]).astype(jnp.float32)
    c = 1.0 / jnp.count_nonzero(t[:, 2]).astype(jnp.float32)
    weights = jnp.stack([a, b, c]) / (a + b + c)
    p = jax.nn.softmax(x, axis=1)
    axes = tuple(range(2, x.ndim))
    TP = (p * t).sum(axis=axes)
    FP = ((1.0 - t) * p).sum(axis=axes)
    FN = (t * (1.0 - p)).sum(axis=axes)
    wt = (weights * ((TP + smooth) / (TP + alpha * FP + beta * FN + smooth))).sum()
    return jnp.power(1.0 - wt, gamma)


if __name__ == "__main__":
    key = jax.random.PRNGKey(0)

    def make_case(k, B, C, D, H, W, dtype):
        k1, k2 = jax.random.split(k)
        logits = jax.random.normal(k1, (B, C, D, H, W), jnp.float32).astype(dtype)
        labels = jax.random.randint(k2, (B, D * H * W), 0, C)
        # Guarantee every class has at least one voxel (1/count_nonzero finite).
        labels = labels.at[:, 0].set(0).at[:, 1].set(1).at[:, 2].set(2)
        labels = labels.reshape(B, D, H, W)
        targets = jax.nn.one_hot(labels, C, axis=1, dtype=dtype)
        return logits, targets

    ka, kb = jax.random.split(key)

    # Case 1: f32, spatial size multiple of 128 (no padding, no masking path).
    x1, t1 = make_case(ka, 2, 3, 4, 8, 8, jnp.float32)          # S = 256
    loss1 = jax.block_until_ready(weighted_focal_tversky_loss_pallas(x1, t1))
    ref1 = weighted_focal_tversky_loss_reference(x1, t1)
    assert jnp.isfinite(loss1), f"non-finite loss: {loss1}"
    assert jnp.allclose(loss1, ref1, rtol=2e-4, atol=1e-5), (loss1, ref1)

    # Case 1b: explicit count_nonzero path (soft/non-binary target support).
    loss1b = jax.block_until_ready(
        weighted_focal_tversky_loss_pallas(x1, t1, binary_targets=False))
    assert jnp.allclose(loss1b, ref1, rtol=2e-4, atol=1e-5), (loss1b, ref1)

    # Case 2: bf16 logits + bf16 one-hot targets, ragged spatial size (lane and
    # row raggedness), multi-tile reduction, 2-way outer split with an overhang
    # step — small max_tile_rows to exercise the full pipeline at tiny shapes.
    x2, t2 = make_case(kb, 1, 3, 5, 13, 65, jnp.bfloat16)        # S = 4225
    loss2 = jax.block_until_ready(
        weighted_focal_tversky_loss_pallas(x2, t2, max_tile_rows=8))
    ref2 = weighted_focal_tversky_loss_reference(x2, t2)
    assert jnp.isfinite(loss2), f"non-finite loss: {loss2}"
    assert jnp.allclose(loss2, ref2, rtol=2e-4, atol=1e-5), (loss2, ref2)

    print("KERNEL_OK")
</pallas_src>

<mosaic_0001>
module attributes {stable_mosaic.version = 11 : i64} {
  func.func @kernel(%arg0: i32, %arg1: i32, %arg2: i32, %arg3: memref<1x3x2x128xf32, #tpu.memory_space<vmem>>, %arg4: memref<1x3x2x128xf32, #tpu.memory_space<vmem>>, %arg5: memref<1x1x9x128xf32, #tpu.memory_space<vmem>>) attributes {dimension_semantics = [#tpu.dimension_semantics<parallel>, #tpu.dimension_semantics<parallel>, #tpu.dimension_semantics<arbitrary>], iteration_bounds = array<i64: 2, 1, 1>, scalar_prefetch = 0 : i64, scratch_operands = 0 : i64, tpu.core_type = #tpu.core_type<tc>, window_params = [{transform_indices = @transform_0, window_bounds = array<i64: 1, 3, 2, 128>}, {transform_indices = @transform_1, window_bounds = array<i64: 1, 3, 2, 128>}, {transform_indices = @transform_2, window_bounds = array<i64: 1, 1, 9, 128>}]} {
    %c0_i32 = arith.constant 0 : i32
    %0 = arith.cmpi eq, %arg2, %c0_i32 : i32
    %1 = arith.extui %0 : i1 to i32
    %c0_i32_0 = arith.constant 0 : i32
    %2 = arith.cmpi ne, %1, %c0_i32_0 : i32
    scf.if %2 {
      %cst_39 = arith.constant 0.000000e+00 : f32
      %58 = vector.broadcast %cst_39 : f32 to vector<1x1x9x128xf32>
      %c0_40 = arith.constant 0 : index
      %c0_41 = arith.constant 0 : index
      %c0_42 = arith.constant 0 : index
      %c0_43 = arith.constant 0 : index
      %59 = vector.load %arg5[%c0_40, %c0_41, %c0_42, %c0_43] : memref<1x1x9x128xf32, #tpu.memory_space<vmem>>, vector<1x1x9x128xf32>
      tpu.vector_store %arg5[%c0_40, %c0_41, %c0_42, %c0_43], %58 {strides = array<i32>} : memref<1x1x9x128xf32, #tpu.memory_space<vmem>>, vector<1x1x9x128xf32>,
    } else {
    }
    %c0 = arith.constant 0 : index
    %c0_1 = arith.constant 0 : index
    %c0_2 = arith.constant 0 : index
    %c0_3 = arith.constant 0 : index
    %3 = vector.load %arg3[%c0, %c0_1, %c0_2, %c0_3] : memref<1x3x2x128xf32, #tpu.memory_space<vmem>>, vector<1x1x2x128xf32>
    %4 = vector.shape_cast %3 : vector<1x1x2x128xf32> to vector<2x128xf32>
    %c0_4 = arith.constant 0 : index
    %c1 = arith.constant 1 : index
    %c0_5 = arith.constant 0 : index
    %c0_6 = arith.constant 0 : index
    %5 = vector.load %arg3[%c0_4, %c1, %c0_5, %c0_6] : memref<1x3x2x128xf32, #tpu.memory_space<vmem>>, vector<1x1x2x128xf32>
    %6 = vector.shape_cast %5 : vector<1x1x2x128xf32> to vector<2x128xf32>
    %c0_7 = arith.constant 0 : index
    %c2 = arith.constant 2 : index
    %c0_8 = arith.constant 0 : index
    %c0_9 = arith.constant 0 : index
    %7 = vector.load %arg3[%c0_7, %c2, %c0_8, %c0_9] : memref<1x3x2x128xf32, #tpu.memory_space<vmem>>, vector<1x1x2x128xf32>
    %8 = vector.shape_cast %7 : vector<1x1x2x128xf32> to vector<2x128xf32>
    %9 = arith.maximumf %4, %6 : vector<2x128xf32>
    %10 = arith.maximumf %9, %8 : vector<2x128xf32>
    %11 = arith.subf %4, %10 : vector<2x128xf32>
    %12 = math.exp %11 : vector<2x128xf32>
    %13 = arith.subf %6, %10 : vector<2x128xf32>
    %14 = math.exp %13 : vector<2x128xf32>
    %15 = arith.subf %8, %10 : vector<2x128xf32>
    %16 = math.exp %15 : vector<2x128xf32>
    %17 = arith.addf %12, %14 : vector<2x128xf32>
    %18 = arith.addf %17, %16 : vector<2x128xf32>
    %cst = arith.constant 1.000000e+00 : f32
    %19 = vector.broadcast %cst : f32 to vector<2x128xf32>
    %20 = arith.divf %19, %18 : vector<2x128xf32>
    %21 = arith.mulf %12, %20 : vector<2x128xf32>
    %c0_10 = arith.constant 0 : index
    %c0_11 = arith.constant 0 : index
    %c0_12 = arith.constant 0 : index
    %c0_13 = arith.constant 0 : index
    %22 = vector.load %arg4[%c0_10, %c0_11, %c0_12, %c0_13] : memref<1x3x2x128xf32, #tpu.memory_space<vmem>>, vector<1x1x2x128xf32>
    %23 = vector.shape_cast %22 : vector<1x1x2x128xf32> to vector<2x128xf32>
    %24 = arith.mulf %21, %23 : vector<2x128xf32>
    %cst_14 = arith.constant dense<0.000000e+00> : vector<128xf32>
    %25 = vector.multi_reduction <add>, %24, %cst_14 [0] : vector<2x128xf32> to vector<128xf32>
    %26 = vector.shape_cast %25 : vector<128xf32> to vector<1x128xf32>
    %cst_15 = arith.constant dense<0.000000e+00> : vector<128xf32>
    %27 = vector.multi_reduction <add>, %21, %cst_15 [0] : vector<2x128xf32> to vector<128xf32>
    %28 = vector.shape_cast %27 : vector<128xf32> to vector<1x128xf32>
    %cst_16 = arith.constant dense<0.000000e+00> : vector<128xf32>
    %29 = vector.multi_reduction <add>, %23, %cst_16 [0] : vector<2x128xf32> to vector<128xf32>
    %30 = vector.shape_cast %29 : vector<128xf32> to vector<1x128xf32>
    %31 = arith.mulf %14, %20 : vector<2x128xf32>
    %c0_17 = arith.constant 0 : index
    %c1_18 = arith.constant 1 : index
    %c0_19 = arith.constant 0 : index
    %c0_20 = arith.constant 0 : index
    %32 = vector.load %arg4[%c0_17, %c1_18, %c0_19, %c0_20] : memref<1x3x2x128xf32, #tpu.memory_space<vmem>>, vector<1x1x2x128xf32>
    %33 = vector.shape_cast %32 : vector<1x1x2x128xf32> to vector<2x128xf32>
    %34 = arith.mulf %31, %33 : vector<2x128xf32>
    %cst_21 = arith.constant dense<0.000000e+00> : vector<128xf32>
    %35 = vector.multi_reduction <add>, %34, %cst_21 [0] : vector<2x128xf32> to vector<128xf32>
    %36 = vector.shape_cast %35 : vector<128xf32> to vector<1x128xf32>
    %cst_22 = arith.constant dense<0.000000e+00> : vector<128xf32>
    %37 = vector.multi_reduction <add>, %31, %cst_22 [0] : vector<2x128xf32> to vector<128xf32>
    %38 = vector.shape_cast %37 : vector<128xf32> to vector<1x128xf32>
    %cst_23 = arith.constant dense<0.000000e+00> : vector<128xf32>
    %39 = vector.multi_reduction <add>, %33, %cst_23 [0] : vector<2x128xf32> to vector<128xf32>
    %40 = vector.shape_cast %39 : vector<128xf32> to vector<1x128xf32>
    %41 = arith.mulf %16, %20 : vector<2x128xf32>
    %c0_24 = arith.constant 0 : index
    %c2_25 = arith.constant 2 : index
    %c0_26 = arith.constant 0 : index
    %c0_27 = arith.constant 0 : index
    %42 = vector.load %arg4[%c0_24, %c2_25, %c0_26, %c0_27] : memref<1x3x2x128xf32, #tpu.memory_space<vmem>>, vector<1x1x2x128xf32>
    %43 = vector.shape_cast %42 : vector<1x1x2x128xf32> to vector<2x128xf32>
    %44 = arith.mulf %41, %43 : vector<2x128xf32>
    %cst_28 = arith.constant dense<0.000000e+00> : vector<128xf32>
    %45 = vector.multi_reduction <add>, %44, %cst_28 [0] : vector<2x128xf32> to vector<128xf32>
    %46 = vector.shape_cast %45 : vector<128xf32> to vector<1x128xf32>
    %cst_29 = arith.constant dense<0.000000e+00> : vector<128xf32>
    %47 = vector.multi_reduction <add>, %41, %cst_29 [0] : vector<2x128xf32> to vector<128xf32>
    %48 = vector.shape_cast %47 : vector<128xf32> to vector<1x128xf32>
    %cst_30 = arith.constant dense<0.000000e+00> : vector<128xf32>
    %49 = vector.multi_reduction <add>, %43, %cst_30 [0] : vector<2x128xf32> to vector<128xf32>
    %50 = vector.shape_cast %49 : vector<128xf32> to vector<1x128xf32>
    %c0_31 = arith.constant 0 : index
    %c0_32 = arith.constant 0 : index
    %c0_33 = arith.constant 0 : index
    %c0_34 = arith.constant 0 : index
    %51 = vector.load %arg5[%c0_31, %c0_32, %c0_33, %c0_34] : memref<1x1x9x128xf32, #tpu.memory_space<vmem>>, vector<1x1x9x128xf32>
    %52 = vector.shape_cast %51 : vector<1x1x9x128xf32> to vector<9x128xf32>
    %53 = tpu.concatenate %26, %28, %30, %36, %38, %40, %46, %48, %50 in 0 : vector<1x128xf32>, vector<1x128xf32>, vector<1x128xf32>, vector<1x128xf32>, vector<1x128xf32>, vector<1x128xf32>, vector<1x128xf32>, vector<1x128xf32>, vector<1x128xf32> -> vector<9x128xf32>
    %54 = arith.addf %52, %53 : vector<9x128xf32>
    %c0_35 = arith.constant 0 : index
    %c0_36 = arith.constant 0 : index
    %c0_37 = arith.constant 0 : index
    %c0_38 = arith.constant 0 : index
    %55 = vector.load %arg5[%c0_35, %c0_36, %c0_37, %c0_38] : memref<1x1x9x128xf32, #tpu.memory_space<vmem>>, vector<1x1x9x128xf32>
    %56 = vector.shape_cast %55 : vector<1x1x9x128xf32> to vector<9x128xf32>
    %57 = vector.shape_cast %54 : vector<9x128xf32> to vector<1x1x9x128xf32>
    tpu.vector_store %arg5[%c0_35, %c0_36, %c0_37, %c0_38], %57 {strides = array<i32>} : memref<1x1x9x128xf32, #tpu.memory_space<vmem>>, vector<1x1x9x128xf32>,
    return
  }
  func.func @transform_0(%arg0: i32, %arg1: i32, %arg2: i32) -> (i32, i32, i32, i32) {
    %c1_i32 = arith.constant 1 : i32
    %0 = arith.muli %arg1, %c1_i32 : i32
    %1 = arith.addi %0, %arg2 : i32
    %c0_i32 = arith.constant 0 : i32
    %2 = arith.minsi %1, %c0_i32 : i32
    %c0_i32_0 = arith.constant 0 : i32
    %c0_i32_1 = arith.constant 0 : i32
    %c0_i32_2 = arith.constant 0 : i32
    return %arg0, %c0_i32_0, %2, %c0_i32_1 : i32, i32, i32, i32
  }
  func.func @transform_1(%arg0: i32, %arg1: i32, %arg2: i32) -> (i32, i32, i32, i32) {
    %c1_i32 = arith.constant 1 : i32
    %0 = arith.muli %arg1, %c1_i32 : i32
    %1 = arith.addi %0, %arg2 : i32
    %c0_i32 = arith.constant 0 : i32
    %2 = arith.minsi %1, %c0_i32 : i32
    %c0_i32_0 = arith.constant 0 : i32
    %c0_i32_1 = arith.constant 0 : i32
    %c0_i32_2 = arith.constant 0 : i32
    return %arg0, %c0_i32_0, %2, %c0_i32_1 : i32, i32, i32, i32
  }
  func.func @transform_2(%arg0: i32, %arg1: i32, %arg2: i32) -> (i32, i32, i32, i32) {
    %c0_i32 = arith.constant 0 : i32
    %c0_i32_0 = arith.constant 0 : i32
    %c0_i32_1 = arith.constant 0 : i32
    return %arg0, %arg1, %c0_i32, %c0_i32_0 : i32, i32, i32, i32
  }
}

</mosaic_0001>

<llo_original>
// kernel: tpu_custom_call.1
$region0: #{tpu_custom_call.1}
  #allocation0 [shape = 'u32[]', space=smem, size = 0x4, offset = 0x4, fixed_abs, tag = 'smem constant byte address 0x4 - core index']
  #allocation1 [shape = 'u32[144,128]{1,0:T(1,128)}', space=vmem, size = 0x12000, scoped, tag = 'internal scratch']
  %s0 = inlined_call_operand.hbm [shape: f32[2,3,2,128], index: 0, kind: input, shape index: {}]
  %s1 = inlined_call_operand.hbm [shape: f32[2,3,2,128], index: 1, kind: input, shape index: {}]
  %s2 = inlined_call_operand.vmem [shape: f32[2,1,9,128], index: 2, kind: output, shape index: {}]
  %s3 = sld [smem:[#allocation0]]
  $region53: #{tpu_custom_call.1} parent=0
    _
  %s5 = ssub.s32 1, %s3
  %s6 = scalar_select 0, %s5, %s3
  $region1: #{tpu_custom_call.1} parent=0
    #allocation2 [shape = 'u8[6144]{0}', space=vmem, size = 0x1800, scoped, tag = 'input window, operand 0']
    #allocation3 [shape = 's32[2]{0}', space=sflag, size = 0x8, scoped, tag = 'scoped memory for tpu_custom_call.1']
    #allocation4 [shape = 'u8[6144]{0}', space=vmem, size = 0x1800, scoped, tag = 'input window, operand 1']
    #allocation5 [shape = 's32[2]{0}', space=sflag, size = 0x8, scoped, tag = 'scoped memory for tpu_custom_call.1']
    %7 = vsyncpa [#allocation3], 0
    %s8 = scalar_lea.sflag [#allocation3], 1
    %9 = vsyncpa %s8, 0
    %10 = vsyncpa [#allocation5], 0
    %s11 = scalar_lea.sflag [#allocation5], 1
    %12 = vsyncpa %s11, 0
    loop: start=0, step=1, limit=4
    $region2: #{tpu_custom_call.1} parent=1 // loop_pre_header
      _
    $region3: #{tpu_custom_call.1} parent=1 // loop_header
      %s14 = sphi 0, %s18
      %p15 = scmp.ge.s32.totalorder %s14, 4
      %s21 = sphi 0, %s40
      %s22 = sphi 0, %s36
      %s23 = sphi 0, %s32
      %s24 = sphi 0, %s21
      %s25 = sphi 0, %s22
      %s26 = sphi 0, %s23
      %s27 = sphi 0, %s24
      %s28 = sphi 0, %s25
      %s29 = sphi 0, %s26
      %s51 = sphi 0, %s53
      %s54 = sphi 0, %s51
      %s55 = sphi 0, %s54
      %s71 = sphi 0, %s55
      %s85 = sphi 0, %s87
      %s88 = sphi 0, %s85
      %s89 = sphi 0, %s88
      %s105 = sphi 0, %s89
      %s113 = sphi 0, %s115
      %s116 = sphi 0, %s113
      %s117 = sphi 0, %s116
      %s133 = sphi 0, %s117
    $region4: #{tpu_custom_call.1} parent=1 // loop_header_branch
      %17 = sbr.rel (%p15) target = $region8
    $region5: #{tpu_custom_call.1} parent=1 // loop_body
      %s19 = ssub.s32 %s14, 1
      %s20 = ssub.s32 %s14, 2
      %s30 = sadd.s32 1, %s23
      %p31 = scmp.ge.s32.totalorder %s30, 1
      %s32 = scalar_select %p31, 0, %s30
      %s33 = sadd.s32 1, %s22
      %s34 = scalar_select %p31, %s33, %s22
      %p35 = scmp.ge.s32.totalorder %s34, 1
      %s36 = scalar_select %p35, 0, %s34
      %s37 = sadd.s32 1, %s21
      %s38 = scalar_select %p35, %s37, %s21
      %p39 = scmp.ge.s32.totalorder %s38, 2
      %s40 = scalar_select %p39, 0, %s38
      %s41 = sadd.s32 %s22, %s23
      %p42 = scmp.lt.s32.totalorder %s41, 0
      %s43 = scalar_select %p42, %s41, 0
      %s44 = sadd.s32 %s36, %s32
      %p45 = scmp.lt.s32.totalorder %s44, 0
      %s46 = scalar_select %p45, %s44, 0
      %s47 = ssub.s32 %s21, %s40
      %s48 = ssub.s32 %s43, %s46
      %s49 = sor.u32 %s47, %s48
      %p50 = scmp.eq.s32.totalorder %s49, 0
      %s52 = sadd.s32 %s51, 1
      %s53 = scalar_select %p50, %s51, %s52
      %p56 = pneg %p50
      %p57 = scmp.eq.s32.totalorder %s14, 1
      %p58 = por %p56, %p57
      %p59 = scmp.ne.s32.totalorder %s51, %s54
      %p60 = scmp.eq.s32.totalorder %s14, 0
      %p61 = por %p59, %p60
      %p62 = scmp.ne.s32.totalorder %s51, %s54
      %p63 = scmp.eq.s32.totalorder %s19, 1
      %p64 = por %p62, %p63
      %p65 = scmp.ne.s32.totalorder %s54, %s55
      %p66 = scmp.eq.s32.totalorder %s19, 0
      %p67 = por %p65, %p66
      %p68 = scmp.ne.s32.totalorder %s54, %s55
      %p69 = scmp.eq.s32.totalorder %s20, 1
      %p70 = por %p68, %p69
      %p72 = scmp.ne.s32.totalorder %s55, %s71
      %p73 = scmp.eq.s32.totalorder %s20, 0
      %p74 = por %p72, %p73
      %s75 = sadd.s32 %s22, %s23
      %p76 = scmp.lt.s32.totalorder %s75, 0
      %s77 = scalar_select %p76, %s75, 0
      %s78 = sadd.s32 %s36, %s32
      %p79 = scmp.lt.s32.totalorder %s78, 0
      %s80 = scalar_select %p79, %s78, 0
      %s81 = ssub.s32 %s21, %s40
      %s82 = ssub.s32 %s77, %s80
      %s83 = sor.u32 %s81, %s82
      %p84 = scmp.eq.s32.totalorder %s83, 0
      %s86 = sadd.s32 %s85, 1
      %s87 = scalar_select %p84, %s85, %s86
      %p90 = pneg %p84
      %p91 = scmp.eq.s32.totalorder %s14, 1
      %p92 = por %p90, %p91
      %p93 = scmp.ne.s32.totalorder %s85, %s88
      %p94 = scmp.eq.s32.totalorder %s14, 0
      %p95 = por %p93, %p94
      %p96 = scmp.ne.s32.totalorder %s85, %s88
      %p97 = scmp.eq.s32.totalorder %s19, 1
      %p98 = por %p96, %p97
      %p99 = scmp.ne.s32.totalorder %s88, %s89
      %p100 = scmp.eq.s32.totalorder %s19, 0
      %p101 = por %p99, %p100
      %p102 = scmp.ne.s32.totalorder %s88, %s89
      %p103 = scmp.eq.s32.totalorder %s20, 1
      %p104 = por %p102, %p103
      %p106 = scmp.ne.s32.totalorder %s89, %s105
      %p107 = scmp.eq.s32.totalorder %s20, 0
      %p108 = por %p106, %p107
      %s109 = ssub.s32 %s21, %s40
      %s110 = ssub.s32 %s22, %s36
      %s111 = sor.u32 %s109, %s110
      %p112 = scmp.eq.s32.totalorder %s111, 0
      %s114 = sadd.s32 %s113, 1
      %s115 = scalar_select %p112, %s113, %s114
      %p118 = pneg %p112
      %p119 = scmp.eq.s32.totalorder %s14, 1
      %p120 = por %p118, %p119
      %p121 = scmp.ne.s32.totalorder %s113, %s116
      %p122 = scmp.eq.s32.totalorder %s14, 0
      %p123 = por %p121, %p122
      %p124 = scmp.ne.s32.totalorder %s113, %s116
      %p125 = scmp.eq.s32.totalorder %s19, 1
      %p126 = por %p124, %p125
      %p127 = scmp.ne.s32.totalorder %s116, %s117
      %p128 = scmp.eq.s32.totalorder %s19, 0
      %p129 = por %p127, %p128
      %p130 = scmp.ne.s32.totalorder %s116, %s117
      %p131 = scmp.eq.s32.totalorder %s20, 1
      %p132 = por %p130, %p131
      %p134 = scmp.ne.s32.totalorder %s117, %s133
      %p135 = scmp.eq.s32.totalorder %s20, 0
      %p136 = por %p134, %p135
      %p137 = scmp.le.s32.totalorder 1, %s14
      %p138 = scmp.lt.s32.totalorder %s14, 3
      %p139 = pnand %p137, %p138
      %p140 = pneg %p139
      // Predicated region
      $region9: #{tpu_custom_call.1} parent=5 // pred_check
        _
      $region10: #{tpu_custom_call.1} parent=5 // pred_check_branch
        %142 = sbr.rel (%p139) target = $region12
      $region11: #{tpu_custom_call.1} parent=5 // pred_region
        %s143 = ssub.s32 %s14, 1
      $region12: #{tpu_custom_call.1} parent=5 // pred_fallthru
        _
      %p144 = scmp.lt.s32.totalorder %s14, 2
      // Predicated region
      $region13: #{tpu_custom_call.1} parent=5 // pred_check
        %p145 = pneg %p144
      $region14: #{tpu_custom_call.1} parent=5 // pred_check_branch
        %147 = sbr.rel (%p145) target = $region16
      $region15: #{tpu_custom_call.1} parent=5 // pred_region
        // Predicated region
        $region17: #{tpu_custom_call.1} parent=15 // pred_check
          %p148 = pneg %p61
        $region18: #{tpu_custom_call.1} parent=15 // pred_check_branch
          %150 = sbr.rel (%p148) target = $region20
        $region19: #{tpu_custom_call.1} parent=15 // pred_region
          %s151 = sand.u32 %s51, 1
          %s152 = scalar_lea.sflag [#allocation3], %s151
          %s153 = sand.u32 %s51, 1
          %s154 = smul.addr %s153, 6
          %s155 = scalar_lea.vmem [#allocation2], %s154
          %s156 = sadd.s32 %s22, %s23
          %p157 = scmp.lt.s32.totalorder %s156, 0
          %s158 = scalar_select %p157, %s156, 0
          %s160 = ssub.s32 96, 96
          %161 = vsyncadd %s152, %s160
          %s162 = smul.addr %s21, 3
          %s163 = sadd.s32 %s158, %s162
          %s164 = smul.addr %s163, 32
          %s165 = scalar_lea.hbm %s0, %s164
          %s166 = sshll.u32 %s155, 4
          %s167 = int_to_ptr.vmem [resolvable:$true] %s166
          %172 = dma.hbm_to_vmem [thread:$0]  %s165, 96, %s167, %s152, 32, 32, 2
        $region20: #{tpu_custom_call.1} parent=15 // pred_fallthru
          _
        // Predicated region
        $region21: #{tpu_custom_call.1} parent=15 // pred_check
          %p173 = pneg %p95
        $region22: #{tpu_custom_call.1} parent=15 // pred_check_branch
          %175 = sbr.rel (%p173) target = $region24
        $region23: #{tpu_custom_call.1} parent=15 // pred_region
          %s176 = sand.u32 %s85, 1
          %s177 = scalar_lea.sflag [#allocation5], %s176
          %s178 = sand.u32 %s85, 1
          %s179 = smul.addr %s178, 6
          %s180 = scalar_lea.vmem [#allocation4], %s179
          %s181 = sadd.s32 %s22, %s23
          %p182 = scmp.lt.s32.totalorder %s181, 0
          %s183 = scalar_select %p182, %s181, 0
          %s185 = ssub.s32 96, 96
          %186 = vsyncadd %s177, %s185
          %s187 = smul.addr %s21, 3
          %s188 = sadd.s32 %s183, %s187
          %s189 = smul.addr %s188, 32
          %s190 = scalar_lea.hbm %s1, %s189
          %s191 = sshll.u32 %s180, 4
          %s192 = int_to_ptr.vmem [resolvable:$true] %s191
          %197 = dma.hbm_to_vmem [thread:$0]  %s190, 96, %s192, %s177, 32, 32, 2
        $region24: #{tpu_custom_call.1} parent=15 // pred_fallthru
          _
      $region16: #{tpu_custom_call.1} parent=5 // pred_fallthru
        _
      %p198 = scmp.le.s32.totalorder 1, %s14
      %p199 = scmp.lt.s32.totalorder %s14, 3
      %p200 = pnand %p198, %p199
      %p201 = pneg %p200
      // Predicated region
      $region25: #{tpu_custom_call.1} parent=5 // pred_check
        _
      $region26: #{tpu_custom_call.1} parent=5 // pred_check_branch
        %203 = sbr.rel (%p200) target = $region28
      $region27: #{tpu_custom_call.1} parent=5 // pred_region
        %s204 = ssub.s32 %s14, 1
        %s205 = sand.u32 %s54, 1
        %s206 = scalar_lea.sflag [#allocation3], %s205
        %s207 = sand.u32 %s54, 1
        %s208 = smul.addr %s207, 6
        %s209 = scalar_lea.vmem [#allocation2], %s208
        // Predicated region
        $region29: #{tpu_custom_call.1} parent=27 // pred_check
          %p210 = pneg %p67
        $region30: #{tpu_custom_call.1} parent=27 // pred_check_branch
          %212 = sbr.rel (%p210) target = $region32
        $region31: #{tpu_custom_call.1} parent=27 // pred_region
          %213 = dma.done %s206, 96
        $region32: #{tpu_custom_call.1} parent=27 // pred_fallthru
          _
        %s214 = sand.u32 %s88, 1
        %s215 = scalar_lea.sflag [#allocation5], %s214
        %s216 = sand.u32 %s88, 1
        %s217 = smul.addr %s216, 6
        %s218 = scalar_lea.vmem [#allocation4], %s217
        // Predicated region
        $region33: #{tpu_custom_call.1} parent=27 // pred_check
          %p219 = pneg %p101
        $region34: #{tpu_custom_call.1} parent=27 // pred_check_branch
          %221 = sbr.rel (%p219) target = $region36
        $region35: #{tpu_custom_call.1} parent=27 // pred_region
          %222 = dma.done %s215, 96
        $region36: #{tpu_custom_call.1} parent=27 // pred_fallthru
          _
        %s223 = sand.u32 %s54, 1
        %s224 = scalar_lea.sflag [#allocation3], %s223
        %s225 = sand.u32 %s54, 1
        %s226 = smul.addr %s225, 6
        %s227 = scalar_lea.vmem [#allocation2], %s226
        %p228 = pneg %p67
        %p229 = pneg %p64
        %s230 = sand.u32 %s88, 1
        %s231 = scalar_lea.sflag [#allocation5], %s230
        %s232 = sand.u32 %s88, 1
        %s233 = smul.addr %s232, 6
        %s234 = scalar_lea.vmem [#allocation4], %s233
        %p235 = pneg %p101
        %p236 = pneg %p98
        %p237 = pneg %p129
        %p238 = pneg %p126
        %p239 = scmp.lt.s32.totalorder %s24, 1
        %s240 = scalar_select %p239, %s24, 1
        %p241 = scmp.lt.s32.totalorder %s25, 0
        %s242 = scalar_select %p241, %s25, 0
        %s243 = smul.addr %s242, 2
        %s244 = smul.addr %s240, 2
        %s245 = sadd.s32 %s243, %s244
        %s246 = smul.addr %s245, 8
        %s247 = scalar_lea.vmem %s2, %s246
        %s248 = sadd.s32 %s25, %s26
        %p249 = scmp.lt.s32.totalorder %s248, 0
        %s250 = scalar_select %p249, %s248, 0
        %s251 = sadd.s32 %s25, %s26
        %p252 = scmp.lt.s32.totalorder %s251, 0
        %s253 = scalar_select %p252, %s251, 0
        %p254 = scmp.lt.s32.totalorder %s24, 1
        %s255 = scalar_select %p254, %s24, 1
        %p256 = scmp.lt.s32.totalorder %s25, 0
        %s257 = scalar_select %p256, %s25, 0
        %s258 = smul.addr %s257, 2
        %s259 = smul.addr %s255, 2
        %s260 = sadd.s32 %s258, %s259
        %s261 = smul.addr %s260, 8
        %s262 = scalar_lea.vmem %s2, %s261
        %p263 = scmp.eq.s32.totalorder %s26, 0
        // Predicated region
        $region37: #{tpu_custom_call.1} parent=27 // pred_check
          %p264 = pneg %p263
        $region38: #{tpu_custom_call.1} parent=27 // pred_check_branch
          %266 = sbr.rel (%p264) target = $region40
        $region39: #{tpu_custom_call.1} parent=27 // pred_region
          %267 = vst [vmem:[%s262] sm:$0xff] 0.0
          %268 = vst [vmem:[%s262 + $0x8] sm:$0x1] 0.0
        $region40: #{tpu_custom_call.1} parent=27 // pred_fallthru
          _
        %v269 = vld [vmem:[%s209] sm:$0x3]
        %s270 = scalar_lea.vmem %s209, 2 [#allocation2]
        %v271 = vld [vmem:[%s270] sm:$0x3]
        %s272 = scalar_lea.vmem %s209, 4 [#allocation2]
        %v273 = vld [vmem:[%s272] sm:$0x3]
        %v274 = vmax.f32 %v269, %v271
        %v275 = vmax.f32 %v274, %v273
        %v276 = vsub.f32 %v269, %v275
        %v277 = vmul.f32 %v276, 1.442695
        %v278 = vpow.pop %v277
        %v279 = vsub.f32 %v271, %v275
        %v280 = vmul.f32 %v279, 1.442695
        %v281 = vpow.pop %v280
        %v282 = vsub.f32 %v273, %v275
        %v283 = vmul.f32 %v282, 1.442695
        %v284 = vpow.pop %v283
        %v285 = vadd.f32 %v278, %v281
        %v286 = vadd.f32 %v285, %v284
        %v287 = vrcp.pop %v286
        %v288 = vmul.f32 1.0, %v287
        %v289 = vmul.f32 %v278, %v288
        %v290 = vld [vmem:[%s218] sm:$0x3]
        %v291 = vmul.f32 %v289, %v290
        %vm292 = vcmask 1041408
        %v293 = vsel %vm292, %v291, 0.0
        %v294 = vrot.slane %v293, 4
        %v295 = vadd.f32 %v293, %v294
        %v296 = vrot.slane %v295, 2
        %v297 = vadd.f32 %v295, %v296
        %v298 = vrot.slane %v297, 1
        %v299 = vadd.f32 %v297, %v298
        %v300 = vsel %vm292, %v289, 0.0
        %v301 = vrot.slane %v300, 4
        %v302 = vadd.f32 %v300, %v301
        %v303 = vrot.slane %v302, 2
        %v304 = vadd.f32 %v302, %v303
        %v305 = vrot.slane %v304, 1
        %v306 = vadd.f32 %v304, %v305
        %v307 = vsel %vm292, %v290, 0.0
        %v308 = vrot.slane %v307, 4
        %v309 = vadd.f32 %v307, %v308
        %v310 = vrot.slane %v309, 2
        %v311 = vadd.f32 %v309, %v310
        %v312 = vrot.slane %v311, 1
        %v313 = vadd.f32 %v311, %v312
        %v314 = vmul.f32 %v281, %v288
        %s315 = scalar_lea.vmem %s218, 2 [#allocation4]
        %v316 = vld [vmem:[%s315] sm:$0x3]
        %v317 = vmul.f32 %v314, %v316
        %v318 = vsel %vm292, %v317, 0.0
        %v319 = vrot.slane %v318, 4
        %v320 = vadd.f32 %v318, %v319
        %v321 = vrot.slane %v320, 2
        %v322 = vadd.f32 %v320, %v321
        %v323 = vrot.slane %v322, 1
        %v324 = vadd.f32 %v322, %v323
        %v325 = vsel %vm292, %v314, 0.0
        %v326 = vrot.slane %v325, 4
        %v327 = vadd.f32 %v325, %v326
        %v328 = vrot.slane %v327, 2
        %v329 = vadd.f32 %v327, %v328
        %v330 = vrot.slane %v329, 1
        %v331 = vadd.f32 %v329, %v330
        %v332 = vsel %vm292, %v316, 0.0
        %v333 = vrot.slane %v332, 4
        %v334 = vadd.f32 %v332, %v333
        %v335 = vrot.slane %v334, 2
        %v336 = vadd.f32 %v334, %v335
        %v337 = vrot.slane %v336, 1
        %v338 = vadd.f32 %v336, %v337
        %v339 = vmul.f32 %v284, %v288
        %s340 = scalar_lea.vmem %s218, 4 [#allocation4]
        %v341 = vld [vmem:[%s340] sm:$0x3]
        %v342 = vmul.f32 %v339, %v341
        %v343 = vsel %vm292, %v342, 0.0
        %v344 = vrot.slane %v343, 4
        %v345 = vadd.f32 %v343, %v344
        %v346 = vrot.slane %v345, 2
        %v347 = vadd.f32 %v345, %v346
        %v348 = vrot.slane %v347, 1
        %v349 = vadd.f32 %v347, %v348
        %v350 = vsel %vm292, %v339, 0.0
        %v351 = vrot.slane %v350, 4
        %v352 = vadd.f32 %v350, %v351
        %v353 = vrot.slane %v352, 2
        %v354 = vadd.f32 %v352, %v353
        %v355 = vrot.slane %v354, 1
        %v356 = vadd.f32 %v354, %v355
        %v357 = vsel %vm292, %v341, 0.0
        %v358 = vrot.slane %v357, 4
        %v359 = vadd.f32 %v357, %v358
        %v360 = vrot.slane %v359, 2
        %v361 = vadd.f32 %v359, %v360
        %v362 = vrot.slane %v361, 1
        %v363 = vadd.f32 %v361, %v362
        %v364 = vld [vmem:[%s262] sm:$0xff]
        %v365 = vld [vmem:[%s262 + $0x8] sm:$0x1]
        %vm366 = vcmask 1040384
        %v367 = vsel %vm366, %v299, %v306
        %v368 = vsel %vm292, %v367, %v313
        %vm369 = vcmask 1042432
        %v370 = vsel %vm369, %v368, %v324
        %vm371 = vcmask 1043456
        %v372 = vsel %vm371, %v370, %v331
        %vm373 = vcmask 1044480
        %v374 = vsel %vm373, %v372, %v338
        %vm375 = vcmask 1045504
        %v376 = vsel %vm375, %v374, %v349
        %vm377 = vcmask 1046528
        %v378 = vsel %vm377, %v376, %v356
        %v379 = vadd.f32 %v364, %v378
        %v380 = vadd.f32 %v365, %v363
        %381 = vst [vmem:[%s262] sm:$0xff] %v379
        %382 = vst [vmem:[%s262 + $0x8] sm:$0x1] %v380
        %p383 = scmp.lt.s32.totalorder %s24, 1
        %s384 = scalar_select %p383, %s24, 1
        %p385 = scmp.lt.s32.totalorder %s25, 0
        %s386 = scalar_select %p385, %s25, 0
        %s387 = smul.addr %s386, 2
        %s388 = smul.addr %s384, 2
        %s389 = sadd.s32 %s387, %s388
        %s390 = smul.addr %s389, 8
        %s391 = scalar_lea.vmem %s2, %s390
        // Predicated region
        $region41: #{tpu_custom_call.1} parent=27 // pred_check
          %p392 = pneg %p126
        $region42: #{tpu_custom_call.1} parent=27 // pred_check_branch
          %394 = sbr.rel (%p392) target = $region44
        $region43: #{tpu_custom_call.1} parent=27 // pred_region
          _
        $region44: #{tpu_custom_call.1} parent=27 // pred_fallthru
          _
      $region28: #{tpu_custom_call.1} parent=5 // pred_fallthru
        _
      %p395 = scmp.le.s32.totalorder 2, %s14
      // Predicated region
      $region45: #{tpu_custom_call.1} parent=5 // pred_check
        %p396 = pneg %p395
      $region46: #{tpu_custom_call.1} parent=5 // pred_check_branch
        %398 = sbr.rel (%p396) target = $region48
      $region47: #{tpu_custom_call.1} parent=5 // pred_region
        %s399 = ssub.s32 %s14, 2
        // Predicated region
        $region49: #{tpu_custom_call.1} parent=47 // pred_check
          %p400 = pneg %p132
        $region50: #{tpu_custom_call.1} parent=47 // pred_check_branch
          %402 = sbr.rel (%p400) target = $region52
        $region51: #{tpu_custom_call.1} parent=47 // pred_region
          %p403 = scmp.lt.s32.totalorder %s27, 1
          %s404 = scalar_select %p403, %s27, 1
          %p405 = scmp.lt.s32.totalorder %s28, 0
          %s406 = scalar_select %p405, %s28, 0
          %s407 = smul.addr %s406, 2
          %s408 = smul.addr %s404, 2
          %s409 = sadd.s32 %s407, %s408
          %s410 = smul.addr %s409, 8
          %s411 = scalar_lea.vmem %s2, %s410
        $region52: #{tpu_custom_call.1} parent=47 // pred_fallthru
          _
      $region48: #{tpu_custom_call.1} parent=5 // pred_fallthru
        _
    $region6: #{tpu_custom_call.1} parent=1 // loop_footer
      %s18 = sadd.s32 1, %s14
    $region7: #{tpu_custom_call.1} parent=1 // loop_footer_branch
      %13 = sbr.rel target = $region3
    $region8: #{tpu_custom_call.1} parent=1 // loop_exit
      _
    %412 = vsyncpa [#allocation3], 1
    %s413 = scalar_lea.sflag [#allocation3], 1
    %414 = vsyncpa %s413, 1
    %415 = vsyncpa [#allocation5], 1
    %s416 = scalar_lea.sflag [#allocation5], 1
    %417 = vsyncpa %s416, 1

</llo_original>
